<compile_context>
chip_gen: v6e
topology: v6e:2x2x1
jax: 0.10.0
libtpu: 0.0.40
codegen_flags: <defaults>
</compile_context>

<pallas_src>
import math
import functools

import jax
import jax.numpy as jnp
from jax.experimental import pallas as pl
from jax.experimental.pallas import tpu as pltpu


def _round_up(x, m):
    return (x + m - 1) // m * m


# ----------------------------------------------------------------------------
# Pallas kernel 1: TopK scoring (lane-dense)
#   scores = scorer_scaled^T . Z^T + mask,  computed per (rows, tile_n) tile.
#   Output is a (1, tile_n) lane-dense slab.
# ----------------------------------------------------------------------------
def _score_kernel(scorer_ref, zt_ref, mask_ref, out_ref):
    # Exact-f32 score: multiply by the (rows, 1) pre-scaled scorer (lane
    # broadcast) and reduce over the feature/sublane axis.
    s = jnp.sum(zt_ref[...] * scorer_ref[...], axis=0, keepdims=True)  # (1, tile_n)
    out_ref[...] = s + mask_ref[...]


def topk_scores(prev_Z, scorer_scaled, mask, *, tile_n=8192):
    n, rows = prev_Z.shape
    zt = prev_Z.T                              # (rows, n): lane-dense node axis
    m = mask.reshape(1, n).astype(jnp.float32)

    tile_n = min(tile_n, _round_up(n, 128))
    n_pad = _round_up(n, tile_n)
    if n_pad != n:
        zt = jnp.pad(zt, ((0, 0), (0, n_pad - n)))
        m = jnp.pad(m, ((0, 0), (0, n_pad - n)),
                    constant_values=-jnp.inf)  # padded nodes never win top-k

    scores = pl.pallas_call(
        _score_kernel,
        out_shape=jax.ShapeDtypeStruct((1, n_pad), jnp.float32),
        grid=(n_pad // tile_n,),
        in_specs=[
            pl.BlockSpec((rows, 1), lambda i: (0, 0)),        # scorer (resident)
            pl.BlockSpec((rows, tile_n), lambda i: (0, i)),   # Z^T tile
            pl.BlockSpec((1, tile_n), lambda i: (0, i)),      # mask tile
        ],
        out_specs=pl.BlockSpec((1, tile_n), lambda i: (0, i)),
        compiler_params=pltpu.CompilerParams(
            dimension_semantics=("parallel",)),
    )(scorer_scaled, zt, m)
    return scores[0, :n]                       # flat (n,)


# ----------------------------------------------------------------------------
# Pallas kernel 2: fused tanh(score) scale + mat-GRU update (grid-less).
#
#   zt  = z_sel * tanh(sel_scores)                      (k, rows)   == TopK out^T
#   g   = [zt | qt]_bf16 @ WUfused_bf16 + b3^T          (k, 3*rows)
#   update = sigmoid(g[:, :r]); reset = sigmoid(g[:, r:2r])
#   h_cap  = tanh(g[:, 2r:] + (reset*qt)_bf16 @ U_h^T)
#   new_Q^T = (1-update)*qt + update*h_cap
# ----------------------------------------------------------------------------
def _fused_gru_kernel(z_ref, sel_ref, qt_ref, wf_ref, uht_ref, b3t_ref, out_ref):
    rows = qt_ref.shape[1]
    qt = qt_ref[...]                                          # (k, rows) f32
    # Note: if every node is masked, sel is -inf and tanh(-inf) = -1 (row sign
    # flip); the PyTorch original would error out in that degenerate case.
    zt = z_ref[...] * jnp.tanh(sel_ref[...])                  # (k, rows) f32

    lhs = jnp.concatenate([zt, qt], axis=1).astype(jnp.bfloat16)     # (k, 2*rows)
    g = jnp.dot(lhs, wf_ref[...],
                preferred_element_type=jnp.float32) + b3t_ref[...]   # (k, 3*rows)

    update = jax.nn.sigmoid(g[:, 0:rows])
    reset = jax.nn.sigmoid(g[:, rows:2 * rows])
    rq = (reset * qt).astype(jnp.bfloat16)
    h_cap = jnp.tanh(g[:, 2 * rows:3 * rows] +
                     jnp.dot(rq, uht_ref[...],
                             preferred_element_type=jnp.float32))
    out_ref[...] = (1.0 - update) * qt + update * h_cap


def fused_gru(z_sel, sel_scores, prev_Q_T, packed):
    k, rows = prev_Q_T.shape
    # Single invocation; all operands are tiny and live fully in VMEM.
    return pl.pallas_call(
        _fused_gru_kernel,
        out_shape=jax.ShapeDtypeStruct((k, rows), jnp.float32),
    )(z_sel, sel_scores, prev_Q_T,
      packed["WUfusedT"], packed["UhT"], packed["b3T"])


# ----------------------------------------------------------------------------
# Forward pass (module semantics: prev_Q/new_Q are (rows, cols))
# ----------------------------------------------------------------------------
def _select_topk(flat_scores, k):
    # TODO(synk): top-k is a data-dependent sort/selection with no clean Pallas
    # TPU equivalent; it stays in plain JAX (jax.lax.top_k), mirroring
    # pad_with_last_val for masked-out entries.
    vals, idx = jax.lax.top_k(flat_scores, k)
    valid = vals > -jnp.inf
    num_valid = jnp.maximum(jnp.sum(valid.astype(jnp.int32)), 1)
    last_valid = idx[num_valid - 1]
    idx = jnp.where(jnp.arange(k) < num_valid, idx, last_valid)
    return idx, flat_scores[idx][:, None]                    # (k,), (k,1)


def mat_gru_cell_forward(packed, prev_Q, prev_Z, mask):
    rows, cols = prev_Q.shape
    assert cols <= prev_Z.shape[0], "top-k requires k (=cols) <= num_nodes"
    flat = topk_scores(prev_Z, packed["scorer_scaled"], mask)   # (N,)
    idx, sel = _select_topk(flat, cols)
    # Data-dependent row gather done once in the wrapper (review option b);
    # only the k selected rows ever reach the GRU kernel.
    z_sel = jnp.take(prev_Z, idx, axis=0)                       # (k, rows)
    new_Q_T = fused_gru(z_sel, sel, prev_Q.T, packed)
    # TODO(synk): if multiple independent GRU cells exist per timestep, stack
    # them along the k axis into one fused_gru call to amortize launch cost.
    return new_Q_T.T                                            # (rows, cols)


# ----------------------------------------------------------------------------
# Parameter initialization (mirrors the PyTorch __init__) + one-time packing
# ----------------------------------------------------------------------------
def init_params(key, rows, cols):
    ks = jax.random.split(key, 7)
    stdv_w = 1.0 / math.sqrt(rows)     # W/U reset_param uses size(1) == rows
    stdv_s = 1.0 / math.sqrt(rows)     # scorer reset_param uses size(0) == feats

    def uni(k, shape, stdv):
        return jax.random.uniform(k, shape, jnp.float32, minval=-stdv, maxval=stdv)

    return {
        "W_u": uni(ks[0], (rows, rows), stdv_w),
        "U_u": uni(ks[1], (rows, rows), stdv_w),
        "b_u": jnp.zeros((rows, cols), jnp.float32),
        "W_r": uni(ks[2], (rows, rows), stdv_w),
        "U_r": uni(ks[3], (rows, rows), stdv_w),
        "b_r": jnp.zeros((rows, cols), jnp.float32),
        "W_h": uni(ks[4], (rows, rows), stdv_w),
        "U_h": uni(ks[5], (rows, rows), stdv_w),
        "b_h": jnp.zeros((rows, cols), jnp.float32),
        "scorer": uni(ks[6], (rows, 1), stdv_s),
    }


def pack_params(params):
    """One-time repack: fused/transposed bf16 weights + pre-scaled scorer."""
    rows = params["W_u"].shape[0]
    W3T = jnp.concatenate([params["W_u"], params["W_r"], params["W_h"]],
                          axis=0).T                            # (rows, 3*rows)
    U2T = jnp.concatenate([params["U_u"], params["U_r"]], axis=0).T  # (rows, 2*rows)
    U3T = jnp.concatenate([U2T, jnp.zeros((rows, rows), U2T.dtype)], axis=1)
    WUfusedT = jnp.concatenate([W3T, U3T], axis=0).astype(jnp.bfloat16)  # (2r, 3r)
    b3T = jnp.concatenate(
        [params["b_u"].T, params["b_r"].T, params["b_h"].T], axis=1)     # (cols, 3r)
    # eps guard for an all-zero scorer (intentional divergence: PyTorch -> nan).
    ss = jnp.sum(params["scorer"].astype(jnp.float32) ** 2)
    inv_norm = jax.lax.rsqrt(jnp.maximum(ss, 1e-12))
    return {
        "scorer_scaled": (params["scorer"] * inv_norm).astype(jnp.float32),  # (rows,1)
        "WUfusedT": WUfusedT,
        "UhT": params["U_h"].T.astype(jnp.bfloat16),
        "b3T": b3T.astype(jnp.float32),
    }


# ----------------------------------------------------------------------------
# Pure-JAX reference (same bf16 weight rounding) for a correctness check
# ----------------------------------------------------------------------------
def _reference_forward(params, prev_Q, prev_Z, mask):
    scorer = params["scorer"]
    inv_norm = jax.lax.rsqrt(jnp.maximum(jnp.sum(scorer * scorer), 1e-12))
    flat = (jnp.matmul(prev_Z, scorer, precision=jax.lax.Precision.HIGHEST)
            * inv_norm + mask)[:, 0]
    k = prev_Q.shape[1]
    idx, sel = _select_topk(flat, k)
    z_topk = (prev_Z[idx] * jnp.tanh(sel)).T                  # (rows, k)

    def bf(x):
        return x.astype(jnp.bfloat16).astype(jnp.float32)

    z_b = bf(z_topk)

    def gate(W, U, b, act, hidden):
        return act(jnp.matmul(bf(W), z_b, precision=jax.lax.Precision.HIGHEST)
                   + jnp.matmul(bf(U), bf(hidden), precision=jax.lax.Precision.HIGHEST)
                   + b)

    update = gate(params["W_u"], params["U_u"], params["b_u"],
                  jax.nn.sigmoid, prev_Q)
    reset = gate(params["W_r"], params["U_r"], params["b_r"],
                 jax.nn.sigmoid, prev_Q)
    h_cap = gate(params["W_h"], params["U_h"], params["b_h"],
                 jnp.tanh, reset * prev_Q)
    return (1.0 - update) * prev_Q + update * h_cap


if __name__ == "__main__":
    rows, cols, num_nodes = 32, 8, 64     # args.rows, args.cols (= k), #nodes

    key = jax.random.PRNGKey(0)
    kp, kq, kz = jax.random.split(key, 3)

    params = init_params(kp, rows, cols)
    packed = pack_params(params)
    prev_Q = jax.random.normal(kq, (rows, cols), jnp.float32)
    prev_Z = jax.random.normal(kz, (num_nodes, rows), jnp.float32)
    mask = jnp.zeros((num_nodes, 1), jnp.float32)   # 0 = keep node, -inf = masked

    fwd = jax.jit(functools.partial(mat_gru_cell_forward, packed))
    new_Q = fwd(prev_Q, prev_Z, mask)
    jax.block_until_ready(new_Q)

    ref = _reference_forward(params, prev_Q, prev_Z, mask)

    assert new_Q.shape == (rows, cols)
    assert bool(jnp.all(jnp.isfinite(new_Q)))
    assert bool(jnp.allclose(new_Q, ref, atol=3e-3, rtol=3e-3)), \
        float(jnp.max(jnp.abs(new_Q - ref)))
    print("KERNEL_OK")
</pallas_src>

<mosaic_0001>
module attributes {stable_mosaic.version = 11 : i64} {
  func.func @_score_kernel(%arg0: i32, %arg1: memref<32x1xf32, #tpu.memory_space<vmem>>, %arg2: memref<32x128xf32, #tpu.memory_space<vmem>>, %arg3: memref<1x128xf32, #tpu.memory_space<vmem>>, %arg4: memref<1x128xf32, #tpu.memory_space<vmem>>) attributes {dimension_semantics = [#tpu.dimension_semantics<parallel>], iteration_bounds = array<i64: 1>, scalar_prefetch = 0 : i64, scratch_operands = 0 : i64, tpu.core_type = #tpu.core_type<tc>, window_params = [{pipeline_mode = #tpu.pipeline_mode<synchronous>, transform_indices = @transform_0, window_bounds = array<i64: 32, 1>}, {transform_indices = @transform_1, window_bounds = array<i64: 32, 128>}, {transform_indices = @transform_2, window_bounds = array<i64: 1, 128>}, {transform_indices = @transform_3, window_bounds = array<i64: 1, 128>}]} {
    %c0 = arith.constant 0 : index
    %c0_0 = arith.constant 0 : index
    %0 = vector.load %arg2[%c0, %c0_0] : memref<32x128xf32, #tpu.memory_space<vmem>>, vector<32x128xf32>
    %c0_1 = arith.constant 0 : index
    %c0_2 = arith.constant 0 : index
    %1 = vector.load %arg1[%c0_1, %c0_2] : memref<32x1xf32, #tpu.memory_space<vmem>>, vector<32x1xf32>
    %2 = vector.broadcast %1 : vector<32x1xf32> to vector<32x128xf32>
    %3 = arith.mulf %0, %2 : vector<32x128xf32>
    %cst = arith.constant dense<0.000000e+00> : vector<128xf32>
    %4 = vector.multi_reduction <add>, %3, %cst [0] : vector<32x128xf32> to vector<128xf32>
    %5 = vector.shape_cast %4 : vector<128xf32> to vector<1x128xf32>
    %c0_3 = arith.constant 0 : index
    %c0_4 = arith.constant 0 : index
    %6 = vector.load %arg3[%c0_3, %c0_4] : memref<1x128xf32, #tpu.memory_space<vmem>>, vector<1x128xf32>
    %7 = arith.addf %5, %6 : vector<1x128xf32>
    %c0_5 = arith.constant 0 : index
    %c0_6 = arith.constant 0 : index
    %8 = vector.load %arg4[%c0_5, %c0_6] : memref<1x128xf32, #tpu.memory_space<vmem>>, vector<1x128xf32>
    tpu.vector_store %arg4[%c0_5, %c0_6], %7 {strides = array<i32>} : memref<1x128xf32, #tpu.memory_space<vmem>>, vector<1x128xf32>,
    return
  }
  func.func @transform_0(%arg0: i32) -> (i32, i32) {
    %c0_i32 = arith.constant 0 : i32
    %c0_i32_0 = arith.constant 0 : i32
    %c0_i32_1 = arith.constant 0 : i32
    return %c0_i32, %c0_i32_0 : i32, i32
  }
  func.func @transform_1(%arg0: i32) -> (i32, i32) {
    %c0_i32 = arith.constant 0 : i32
    %c0_i32_0 = arith.constant 0 : i32
    return %c0_i32, %arg0 : i32, i32
  }
  func.func @transform_2(%arg0: i32) -> (i32, i32) {
    %c0_i32 = arith.constant 0 : i32
    %c0_i32_0 = arith.constant 0 : i32
    return %c0_i32, %arg0 : i32, i32
  }
  func.func @transform_3(%arg0: i32) -> (i32, i32) {
    %c0_i32 = arith.constant 0 : i32
    %c0_i32_0 = arith.constant 0 : i32
    return %c0_i32, %arg0 : i32, i32
  }
}

module attributes {stable_mosaic.version = 11 : i64} {
  func.func @_fused_gru_kernel(%arg0: memref<8x32xf32, #tpu.memory_space<vmem>>, %arg1: memref<8x1xf32, #tpu.memory_space<vmem>>, %arg2: memref<8x32xf32, #tpu.memory_space<vmem>>, %arg3: memref<64x96xbf16, #tpu.memory_space<vmem>>, %arg4: memref<32x32xbf16, #tpu.memory_space<vmem>>, %arg5: memref<8x96xf32, #tpu.memory_space<vmem>>, %arg6: memref<8x32xf32, #tpu.memory_space<vmem>>) attributes {dimension_semantics = [], scalar_prefetch = 0 : i64, scratch_operands = 0 : i64, tpu.core_type = #tpu.core_type<tc>} {
    %c0 = arith.constant 0 : index
    %c0_0 = arith.constant 0 : index
    %0 = vector.load %arg2[%c0, %c0_0] : memref<8x32xf32, #tpu.memory_space<vmem>>, vector<8x32xf32>
    %c0_1 = arith.constant 0 : index
    %c0_2 = arith.constant 0 : index
    %1 = vector.load %arg0[%c0_1, %c0_2] : memref<8x32xf32, #tpu.memory_space<vmem>>, vector<8x32xf32>
    %c0_3 = arith.constant 0 : index
    %c0_4 = arith.constant 0 : index
    %2 = vector.load %arg1[%c0_3, %c0_4] : memref<8x1xf32, #tpu.memory_space<vmem>>, vector<8x1xf32>
    %3 = math.tanh %2 : vector<8x1xf32>
    %4 = vector.broadcast %3 : vector<8x1xf32> to vector<8x32xf32>
    %5 = arith.mulf %1, %4 : vector<8x32xf32>
    %6 = tpu.concatenate %5, %0 in 1 : vector<8x32xf32>, vector<8x32xf32> -> vector<8x64xf32>
    %7 = arith.truncf %6 : vector<8x64xf32> to vector<8x64xbf16>
    %c0_5 = arith.constant 0 : index
    %c0_6 = arith.constant 0 : index
    %8 = vector.load %arg3[%c0_5, %c0_6] : memref<64x96xbf16, #tpu.memory_space<vmem>>, vector<64x96xbf16>
    %cst = arith.constant dense<0.000000e+00> : vector<8x96xf32>
    %9 = tpu.matmul %7, %8, %cst {dimension_numbers = #tpu.dot_dimension_numbers<[1], [0], [0], [1], [0, 0, 1, 1], [], []>} : vector<8x64xbf16>, vector<64x96xbf16>, vector<8x96xf32> -> vector<8x96xf32>
    %c0_7 = arith.constant 0 : index
    %c0_8 = arith.constant 0 : index
    %10 = vector.load %arg5[%c0_7, %c0_8] : memref<8x96xf32, #tpu.memory_space<vmem>>, vector<8x96xf32>
    %11 = arith.addf %9, %10 : vector<8x96xf32>
    %12 = vector.extract_strided_slice %11 {offsets = [0, 0], sizes = [8, 32], strides = [1, 1]} : vector<8x96xf32> to vector<8x32xf32>
    %13 = arith.negf %12 : vector<8x32xf32>
    %14 = math.exp %13 : vector<8x32xf32>
    %cst_9 = arith.constant 1.000000e+00 : f32
    %15 = vector.broadcast %cst_9 : f32 to vector<8x32xf32>
    %16 = arith.addf %15, %14 : vector<8x32xf32>
    %17 = arith.divf %15, %16 : vector<8x32xf32>
    %18 = vector.extract_strided_slice %11 {offsets = [0, 32], sizes = [8, 32], strides = [1, 1]} : vector<8x96xf32> to vector<8x32xf32>
    %19 = arith.negf %18 : vector<8x32xf32>
    %20 = math.exp %19 : vector<8x32xf32>
    %cst_10 = arith.constant 1.000000e+00 : f32
    %21 = vector.broadcast %cst_10 : f32 to vector<8x32xf32>
    %22 = arith.addf %21, %20 : vector<8x32xf32>
    %23 = arith.divf %21, %22 : vector<8x32xf32>
    %24 = arith.mulf %23, %0 : vector<8x32xf32>
    %25 = arith.truncf %24 : vector<8x32xf32> to vector<8x32xbf16>
    %26 = vector.extract_strided_slice %11 {offsets = [0, 64], sizes = [8, 32], strides = [1, 1]} : vector<8x96xf32> to vector<8x32xf32>
    %c0_11 = arith.constant 0 : index
    %c0_12 = arith.constant 0 : index
    %27 = vector.load %arg4[%c0_11, %c0_12] : memref<32x32xbf16, #tpu.memory_space<vmem>>, vector<32x32xbf16>
    %cst_13 = arith.constant dense<0.000000e+00> : vector<8x32xf32>
    %28 = tpu.matmul %25, %27, %cst_13 {dimension_numbers = #tpu.dot_dimension_numbers<[1], [0], [0], [1], [0, 0, 1, 1], [], []>} : vector<8x32xbf16>, vector<32x32xbf16>, vector<8x32xf32> -> vector<8x32xf32>
    %29 = arith.addf %26, %28 : vector<8x32xf32>
    %30 = math.tanh %29 : vector<8x32xf32>
    %cst_14 = arith.constant 1.000000e+00 : f32
    %31 = vector.broadcast %cst_14 : f32 to vector<8x32xf32>
    %32 = arith.subf %31, %17 : vector<8x32xf32>
    %33 = arith.mulf %32, %0 : vector<8x32xf32>
    %34 = arith.mulf %17, %30 : vector<8x32xf32>
    %35 = arith.addf %33, %34 : vector<8x32xf32>
    %c0_15 = arith.constant 0 : index
    %c0_16 = arith.constant 0 : index
    %36 = vector.load %arg6[%c0_15, %c0_16] : memref<8x32xf32, #tpu.memory_space<vmem>>, vector<8x32xf32>
    tpu.vector_store %arg6[%c0_15, %c0_16], %35 {strides = array<i32>} : memref<8x32xf32, #tpu.memory_space<vmem>>, vector<8x32xf32>,
    return
  }
}

</mosaic_0001>

<llo_original>
// kernel: mat_gru_cell_forward.2
$region0: #{mat_gru_cell_forward.2}
  #allocation0 [shape = 'u32[]', space=smem, size = 0x4, offset = 0x4, fixed_abs, tag = 'smem constant byte address 0x4 - core index']
  #allocation1 [shape = 'u32[144,128]{1,0:T(1,128)}', space=vmem, size = 0x12000, scoped, tag = 'internal scratch']
  %s0 = inlined_call_operand.vmem [shape: f32[32,1], index: 0, kind: input, shape index: {}]
  %s1 = inlined_call_operand.vmem [shape: f32[32,128], index: 1, kind: input, shape index: {}]
  %s2 = inlined_call_operand.vmem [shape: f32[1,128], index: 2, kind: input, shape index: {}]
  %s3 = inlined_call_operand.vmem [shape: f32[1,128], index: 3, kind: output, shape index: {}]
  %s4 = sld [smem:[#allocation0]]
  $region22: #{mat_gru_cell_forward.2} parent=0
    _
  %s6 = ssub.s32 1, %s4
  %s7 = scalar_select 0, %s6, %s4
  // Predicated region
  $region2: #{mat_gru_cell_forward.2} parent=0 // pred_check
    _
  $region3: #{mat_gru_cell_forward.2} parent=0 // pred_check_branch
    %9 = sbr.rel (0) target = $region5
  $region4: #{mat_gru_cell_forward.2} parent=0 // pred_region
    _
  $region5: #{mat_gru_cell_forward.2} parent=0 // pred_fallthru
    _
  // Predicated region
  $region6: #{mat_gru_cell_forward.2} parent=0 // pred_check
    _
  $region7: #{mat_gru_cell_forward.2} parent=0 // pred_check_branch
    %11 = sbr.rel (0) target = $region9
  $region8: #{mat_gru_cell_forward.2} parent=0 // pred_region
    _
  $region9: #{mat_gru_cell_forward.2} parent=0 // pred_fallthru
    _
  // Predicated region
  $region10: #{mat_gru_cell_forward.2} parent=0 // pred_check
    _
  $region11: #{mat_gru_cell_forward.2} parent=0 // pred_check_branch
    %13 = sbr.rel (0) target = $region13
  $region12: #{mat_gru_cell_forward.2} parent=0 // pred_region
    _
  $region13: #{mat_gru_cell_forward.2} parent=0 // pred_fallthru
    _
  %v14 = vld [vmem:[%s1] sm:$0xff]
  %v15 = vld [vmem:[%s1 + $0x8] sm:$0xff]
  %v16 = vld [vmem:[%s1 + $0x10] sm:$0xff]
  %v17 = vld [vmem:[%s1 + $0x18] sm:$0xff]
  %v18 = vld [vmem:[%s0] sm:$0xff]
  %v19 = vld [vmem:[%s0 + $0x8] sm:$0xff]
  %v20 = vld [vmem:[%s0 + $0x10] sm:$0xff]
  %v21 = vld [vmem:[%s0 + $0x18] sm:$0xff]
  %23 = vset.pattern.permute.xlu0 0
  %24 = vperm.xlu0 %23, %v18
  %v25 = vpop.permute.xlu0 %24
  %28 = vset.pattern.permute.xlu0 0
  %29 = vperm.xlu0 %28, %v19
  %v30 = vpop.permute.xlu0 %29
  %33 = vset.pattern.permute.xlu0 0
  %34 = vperm.xlu0 %33, %v20
  %v35 = vpop.permute.xlu0 %34
  %38 = vset.pattern.permute.xlu0 0
  %39 = vperm.xlu0 %38, %v21
  %v40 = vpop.permute.xlu0 %39
  %v42 = vmul.f32 %v14, %v25
  %v43 = vmul.f32 %v15, %v30
  %v44 = vmul.f32 %v16, %v35
  %v45 = vmul.f32 %v17, %v40
  %v46 = vadd.f32 %v42, %v43
  %v47 = vadd.f32 %v46, %v44
  %v48 = vadd.f32 %v47, %v45
  %v49 = vrot.slane %v48, 4
  %v50 = vadd.f32 %v48, %v49
  %v51 = vrot.slane %v50, 2
  %v52 = vadd.f32 %v50, %v51
  %v53 = vrot.slane %v52, 1
  %v54 = vadd.f32 %v52, %v53
  %v55 = vld [vmem:[%s2] sm:$0x1]
  %v56 = vadd.f32 %v54, %v55
  %57 = vst [vmem:[%s3] sm:$0x1] %v56
  // Predicated region
  $region14: #{mat_gru_cell_forward.2} parent=0 // pred_check
    _
  $region15: #{mat_gru_cell_forward.2} parent=0 // pred_check_branch
    %59 = sbr.rel (0) target = $region17
  $region16: #{mat_gru_cell_forward.2} parent=0 // pred_region
    _
  $region17: #{mat_gru_cell_forward.2} parent=0 // pred_fallthru
    _
  // Predicated region
  $region18: #{mat_gru_cell_forward.2} parent=0 // pred_check
    _
  $region19: #{mat_gru_cell_forward.2} parent=0 // pred_check_branch
    %61 = sbr.rel (0) target = $region21
  $region20: #{mat_gru_cell_forward.2} parent=0 // pred_region
    _
  $region21: #{mat_gru_cell_forward.2} parent=0 // pred_fallthru
    _

// kernel: mat_gru_cell_forward.3
$region0: #{mat_gru_cell_forward.3}
  #allocation0 [shape = 'u32[]', space=smem, size = 0x4, offset = 0x4, fixed_abs, tag = 'smem constant byte address 0x4 - core index']
  #allocation1 [shape = 'u32[144,128]{1,0:T(1,128)}', space=vmem, size = 0x12000, scoped, tag = 'internal scratch']
  %s0 = inlined_call_operand.vmem [shape: f32[8,32], index: 0, kind: input, shape index: {}]
  %s1 = inlined_call_operand.vmem [shape: f32[8,1], index: 1, kind: input, shape index: {}]
  %s2 = inlined_call_operand.vmem [shape: f32[8,32], index: 2, kind: input, shape index: {}]
  %s3 = inlined_call_operand.vmem [shape: bf16[64,96], index: 3, kind: input, shape index: {}]
  %s4 = inlined_call_operand.vmem [shape: bf16[32,32], index: 4, kind: input, shape index: {}]
  %s5 = inlined_call_operand.vmem [shape: f32[8,96], index: 5, kind: input, shape index: {}]
  %s6 = inlined_call_operand.hbm [shape: f32[8,32], index: 6, kind: output, shape index: {}]
  %s7 = sld [smem:[#allocation0]]
  $region34: #{mat_gru_cell_forward.3} parent=0
    _
  %s9 = ssub.s32 1, %s7
  %s10 = scalar_select 0, %s9, %s7
  $region1: #{mat_gru_cell_forward.3} parent=0
    #allocation2 [shape = 'u8[4096]{0}', space=vmem, size = 0x1000, scoped, tag = 'output window, operand 0, single buffered']
    #allocation3 [shape = 's32[1]{0}', space=sflag, size = 0x4, scoped, tag = 'scoped memory for mat_gru_cell_forward.3']
    %11 = vsyncpa [#allocation3], 0
    // Predicated region
    $region2: #{mat_gru_cell_forward.3} parent=1 // pred_check
      _
    $region3: #{mat_gru_cell_forward.3} parent=1 // pred_check_branch
      %13 = sbr.rel (0) target = $region5
    $region4: #{mat_gru_cell_forward.3} parent=1 // pred_region
      _
    $region5: #{mat_gru_cell_forward.3} parent=1 // pred_fallthru
      _
    // Predicated region
    $region6: #{mat_gru_cell_forward.3} parent=1 // pred_check
      _
    $region7: #{mat_gru_cell_forward.3} parent=1 // pred_check_branch
      %15 = sbr.rel (0) target = $region9
    $region8: #{mat_gru_cell_forward.3} parent=1 // pred_region
      _
    $region9: #{mat_gru_cell_forward.3} parent=1 // pred_fallthru
      _
    // Predicated region
    $region10: #{mat_gru_cell_forward.3} parent=1 // pred_check
      _
    $region11: #{mat_gru_cell_forward.3} parent=1 // pred_check_branch
      %17 = sbr.rel (0) target = $region13
    $region12: #{mat_gru_cell_forward.3} parent=1 // pred_region
      _
    $region13: #{mat_gru_cell_forward.3} parent=1 // pred_fallthru
      _
    // Predicated region
    $region14: #{mat_gru_cell_forward.3} parent=1 // pred_check
      _
    $region15: #{mat_gru_cell_forward.3} parent=1 // pred_check_branch
      %19 = sbr.rel (0) target = $region17
    $region16: #{mat_gru_cell_forward.3} parent=1 // pred_region
      _
    $region17: #{mat_gru_cell_forward.3} parent=1 // pred_fallthru
      _
    // Predicated region
    $region18: #{mat_gru_cell_forward.3} parent=1 // pred_check
      _
    $region19: #{mat_gru_cell_forward.3} parent=1 // pred_check_branch
      %21 = sbr.rel (0) target = $region21
    $region20: #{mat_gru_cell_forward.3} parent=1 // pred_region
      _
    $region21: #{mat_gru_cell_forward.3} parent=1 // pred_fallthru
      _
    // Predicated region
    $region22: #{mat_gru_cell_forward.3} parent=1 // pred_check
      _
    $region23: #{mat_gru_cell_forward.3} parent=1 // pred_check_branch
      %23 = sbr.rel (0) target = $region25
    $region24: #{mat_gru_cell_forward.3} parent=1 // pred_region
      _
    $region25: #{mat_gru_cell_forward.3} parent=1 // pred_fallthru
      _
    %v25 = vld [vmem:[%s2] sm:$0xff]
    %v26 = vld [vmem:[%s0] sm:$0xff]
    %v27 = vld [vmem:[%s1] sm:$0xff]
    %v28 = vtanh.pop %v27
    %30 = vset.pattern.permute.xlu0 0
    %31 = vperm.xlu0 %30, %v28
    %v32 = vpop.permute.xlu0 %31
    %v34 = vmul.f32 %v26, %v32
    %36 = vrot.lane.b32.xlu0 %v25, 32
    %v37 = vpop.permute.xlu0 %36
    %vm39 = vcmask 261120
    %v40 = vsel %vm39, %v34, %v37
    %v41 = vpack.c.bf16 %v40, %v40
    %v42 = vld [vmem:[%s3] sm:$0xf]
    %v43 = vld [vmem:[%s3 + $0x4] sm:$0xf]
    %v44 = vld [vmem:[%s3 + $0x8] sm:$0xf]
    %v45 = vld [vmem:[%s3 + $0xc] sm:$0xf]
    %v46 = vld [vmem:[%s3 + $0x10] sm:$0xf]
    %v47 = vld [vmem:[%s3 + $0x14] sm:$0xf]
    %v48 = vld [vmem:[%s3 + $0x18] sm:$0xf]
    %v49 = vld [vmem:[%s3 + $0x1c] sm:$0xf]
    %v50 = vld [vmem:[%s5] sm:$0xff]
    %v59 = vunpack.c.l.b16 %v42
    %v60 = vunpack.c.l.b16 %v43
    %v61 = vunpack.c.l.b16 %v44
    %v62 = vunpack.c.l.b16 %v45
    %v63 = vunpack.c.l.b16 %v46
    %v64 = vunpack.c.l.b16 %v47
    %v65 = vunpack.c.l.b16 %v48
    %v66 = vunpack.c.l.b16 %v49
    %v67 = vpack.c.b16 %v60, %v59
    %v68 = vpack.c.b16 %v62, %v61
    %v69 = vpack.c.b16 %v64, %v63
    %v70 = vpack.c.b16 %v66, %v65
    %vm75 = vcmask 523264
    %v77 = vsel %vm75, %v41, 0
    %79 = vmatprep.subr.bf16.mxu0 0
    %80 = vmatpush1.bf16.msra.mxu0 0
    %81 = vmatprep.subr.bf16.mxu0 0
    %82 = vmatpush1.bf16.msra.mxu0 0
    %83 = vmatprep.subr.bf16.mxu0 0
    %84 = vmatpush1.bf16.msra.mxu0 0
    %85 = vmatprep.subr.bf16.mxu0 0
    %86 = vmatpush1.bf16.msra.mxu0 0
    %87 = vmatprep.subr.bf16.mxu0 0
    %88 = vmatpush1.bf16.msra.mxu0 %v70
    %89 = vmatprep.subr.bf16.mxu0 0
    %90 = vmatpush1.bf16.msra.mxu0 %v69
    %91 = vmatprep.subr.bf16.mxu0 0
    %92 = vmatpush1.bf16.msra.mxu0 %v68
    %93 = vmatprep.subr.bf16.mxu0 0
    %94 = vmatpush1.bf16.msra.mxu0 %v67
    %95 = vmatprep.subr.bf16.mxu0 0
    %96 = vmatpush2.bf16.msra.mxu0 0
    %97 = vmatprep.subr.bf16.mxu0 0
    %98 = vmatpush2.bf16.msra.mxu0 0
    %99 = vmatprep.subr.bf16.mxu0 0
    %100 = vmatpush2.bf16.msra.mxu0 0
    %101 = vmatprep.subr.bf16.mxu0 0
    %102 = vmatpush2.bf16.msra.mxu0 0
    %103 = vmatprep.subr.bf16.mxu0 0
    %104 = vmatpush2.bf16.msra.mxu0 0
    %105 = vmatprep.subr.bf16.mxu0 0
    %106 = vmatpush2.bf16.msra.mxu0 0
    %107 = vmatprep.subr.bf16.mxu0 0
    %108 = vmatpush2.bf16.msra.mxu0 0
    %109 = vmatprep.subr.bf16.mxu0 0
    %110 = vmatpush2.bf16.msra.mxu0 0
    %111 = vmatprep.mubr.bf16.mxu0 0
    %112 = vmatmul.mubr.bf16.gmra.mxu0 %v77
    %v113 = vpop.f32.mrf.mxu0
    %v114 = vadd.f32 %v50, %v113
    %v115 = vpop.f32.mrf.mxu0
    %v116 = vpop.f32.mrf.mxu0
    %v117 = vpop.f32.mrf.mxu0
    %118 = vdwg.mxu0
    %v119 = vxor.u32 %v114, 2147483648
    %v120 = vmul.f32 %v119, 1.442695
    %v121 = vpow.pop %v120
    %v122 = vadd.f32 %v121, 1.0
    %v123 = vrcp.pop %v122
    %v124 = vmul.f32 1.0, %v123
    %v125 = vmul.f32 %v124, %v37
    %v126 = vpack.c.bf16 %v125, %v125
    %v127 = vld [vmem:[%s4] sm:$0xf]
    %v128 = vld [vmem:[%s4 + $0x4] sm:$0xf]
    %v129 = vld [vmem:[%s4 + $0x8] sm:$0xf]
    %v130 = vld [vmem:[%s4 + $0xc] sm:$0xf]
    %132 = vrot.lane.b32.xlu0 %v126, 96
    %v133 = vpop.permute.xlu0 %132
    %v138 = vunpack.c.l.b16 %v127
    %v139 = vunpack.c.l.b16 %v128
    %v140 = vunpack.c.l.b16 %v129
    %v141 = vunpack.c.l.b16 %v130
    %v142 = vpack.c.b16 %v139, %v138
    %v143 = vpack.c.b16 %v141, %v140
    %v147 = vsel %vm39, %v133, 0
    %149 = vmatprep.subr.bf16.mxu0 0
    %150 = vmatpush1.bf16.msra.mxu0 0
    %151 = vmatprep.subr.bf16.mxu0 0
    %152 = vmatpush1.bf16.msra.mxu0 0
    %153 = vmatprep.subr.bf16.mxu0 0
    %154 = vmatpush1.bf16.msra.mxu0 0
    %155 = vmatprep.subr.bf16.mxu0 0
    %156 = vmatpush1.bf16.msra.mxu0 0
    %157 = vmatprep.subr.bf16.mxu0 0
    %158 = vmatpush1.bf16.msra.mxu0 0
    %159 = vmatprep.subr.bf16.mxu0 0
    %160 = vmatpush1.bf16.msra.mxu0 0
    %161 = vmatprep.subr.bf16.mxu0 0
    %162 = vmatpush1.bf16.msra.mxu0 %v143
    %163 = vmatprep.subr.bf16.mxu0 0
    %164 = vmatpush1.bf16.msra.mxu0 %v142
    %165 = vmatprep.subr.bf16.mxu0 0
    %166 = vmatpush2.bf16.msra.mxu0 0
    %167 = vmatprep.subr.bf16.mxu0 0
    %168 = vmatpush2.bf16.msra.mxu0 0
    %169 = vmatprep.subr.bf16.mxu0 0
    %170 = vmatpush2.bf16.msra.mxu0 0
    %171 = vmatprep.subr.bf16.mxu0 0
    %172 = vmatpush2.bf16.msra.mxu0 0
    %173 = vmatprep.subr.bf16.mxu0 0
    %174 = vmatpush2.bf16.msra.mxu0 0
    %175 = vmatprep.subr.bf16.mxu0 0
    %176 = vmatpush2.bf16.msra.mxu0 0
    %177 = vmatprep.subr.bf16.mxu0 0
    %178 = vmatpush2.bf16.msra.mxu0 0
    %179 = vmatprep.subr.bf16.mxu0 0
    %180 = vmatpush2.bf16.msra.mxu0 0
    %181 = vmatprep.mubr.bf16.mxu0 0
    %182 = vmatmul.mubr.bf16.gmra.mxu0 %v147
    %v183 = vpop.f32.mrf.mxu0
    %v184 = vadd.f32 0.0, %v183
    %v185 = vpop.f32.mrf.mxu0
    %v186 = vpop.f32.mrf.mxu0
    %v187 = vpop.f32.mrf.mxu0
    %188 = vdwg.mxu0
    %190 = vrot.lane.b32.xlu0 %v184, 64
    %v191 = vpop.permute.xlu0 %190
    %v193 = vadd.f32 %v114, %v191
    %v194 = vtanh.pop %v193
    %v195 = vsub.f32 1.0, %v124
    %v196 = vmul.f32 %v195, %v25
    %198 = vrot.lane.b32.xlu0 %v194, 64
    %v199 = vpop.permute.xlu0 %198
    %v201 = vmul.f32 %v124, %v199
    %v202 = vadd.f32 %v196, %v201
    %203 = vst.msk [vmem:[#allocation2] sm:$0xff] %vm39, %v202
    // Predicated region
    $region26: #{mat_gru_cell_forward.3} parent=1 // pred_check
      _
    $region27: #{mat_gru_cell_forward.3} parent=1 // pred_check_branch
      %205 = sbr.rel (0) target = $region29
    $region28: #{mat_gru_cell_forward.3} parent=1 // pred_region
      %s207 = ssub.s32 128, 128
      %208 = vsyncadd [#allocation3], %s207
      %s210 = sshll.u32 [#allocation2], 4
      %s211 = int_to_ptr.vmem [resolvable:$true] %s210
      %213 = dma.vmem_to_hbm [thread:$0]  %s211, 128, %s6, [#allocation3]
    $region29: #{mat_gru_cell_forward.3} parent=1 // pred_fallthru
      _
    // Predicated region
    $region30: #{mat_gru_cell_forward.3} parent=1 // pred_check
      _
    $region31: #{mat_gru_cell_forward.3} parent=1 // pred_check_branch
      %215 = sbr.rel (0) target = $region33
    $region32: #{mat_gru_cell_forward.3} parent=1 // pred_region
      %216 = dma.done [#allocation3], 128
    $region33: #{mat_gru_cell_forward.3} parent=1 // pred_fallthru
      _
    %217 = vsyncpa [#allocation3], 1

</llo_original>
